<compile_context>
chip_gen: v7x
topology: tpu7x:2x2x1
jax: 0.10.0
libtpu: 0.0.40
codegen_flags: <defaults>
</compile_context>

<pallas_src>
import math

import jax
import jax.numpy as jnp
from jax import lax
from jax.experimental import pallas as pl
from jax.experimental.pallas import tpu as pltpu


def tree_attn_kernel(hid_ref, enc_ref, w_h_ref, w_e_ref, b_attn_ref,
                     w_score_ref, mask_ref, out_ref, pad_ref):
    S, TB, I = enc_ref.shape
    H = w_h_ref.shape[1]
    S_pad = out_ref.shape[1]
    cdt = w_h_ref.dtype                         # MXU compute dtype (bf16 by default)

    # ---- hidden half of the concat-linear (+ attn bias), once per batch row ----
    hid = hid_ref[...].astype(cdt)                                     # (TB, H)
    hid_proj = jnp.dot(hid, w_h_ref[...],
                       preferred_element_type=jnp.float32)             # (TB, H) f32
    bias_eff = hid_proj + b_attn_ref[...]                              # fold b_attn once

    # ---- encoder half: (S*TB, I) @ (I, H) on the MXU ----
    # (S, TB, I) -> (S*TB, I) is layout preserving: TB == 8 is one full sublane
    # tile and the minor dim I is untouched, so this is a relabel, not a copy.
    enc2 = enc_ref[...].astype(cdt).reshape(S * TB, I)
    eproj = jnp.dot(enc2, w_e_ref[...],
                    preferred_element_type=jnp.float32)                # (S*TB, H) f32
    feat = jnp.tanh(eproj.reshape(S, TB, H) + bias_eff[None, :, :])    # (S, TB, H) f32

    # ---- score projection: VPU multiply + lane reduce (no N=1 MXU matmul) ----
    scores_sb = jnp.sum(feat * w_score_ref[...][None, :, :], axis=-1)  # (S, TB) f32

    # ---- (S, TB) -> (TB, S) via a tiny identity matmul (contract-last-dims form,
    #      i.e. the q @ k.T pattern) so we never rely on vector.transpose lowering.
    r = lax.broadcasted_iota(jnp.int32, (TB, TB), 0)
    c = lax.broadcasted_iota(jnp.int32, (TB, TB), 1)
    eye = (r == c).astype(jnp.float32)
    scores = lax.dot_general(eye, scores_sb, (((1,), (1,)), ((), ())),
                             preferred_element_type=jnp.float32)       # (TB, S) f32

    # ---- additive mask bias + lane-dense padded softmax over S ----
    scores = scores + mask_ref[...]                                    # (TB, S)
    if S_pad > S:                                     # static at trace time
        pad_ref[...] = jnp.full((TB, S_pad), -1e30, jnp.float32)
        pad_ref[:, :S] = scores
        scores = pad_ref[...]                                          # (TB, S_pad)
    m = jnp.max(scores, axis=-1, keepdims=True)
    e = jnp.exp(scores - m)                            # pad columns -> exactly 0
    denom = jnp.sum(e, axis=-1, keepdims=True)
    out_ref[...] = e * pl.reciprocal(denom, approx=True)


def prepare_tree_attn_params(params, hidden_size, compute_dtype=jnp.bfloat16):
    """One-time weight preprocessing -- hoist out of the decode loop.

    Splits the concat-linear weight (cat order is (hidden, encoder_outputs)),
    transposes for right-multiplication and casts the MXU operands.  b_score is
    dropped: a scalar added to every energy cancels in the softmax.
    """
    W_attn, b_attn, W_score, _b_score = params
    H = hidden_size
    w_h = W_attn[:, :H].T.astype(compute_dtype)            # (H, H)
    w_e = W_attn[:, H:].T.astype(compute_dtype)            # (I, H)
    b_a = b_attn.reshape(1, H).astype(jnp.float32)         # (1, H)
    w_s = W_score.reshape(1, H).astype(jnp.float32)        # (1, H)
    return w_h, w_e, b_a, w_s


def tree_attn_forward(hidden, encoder_outputs, prepared, seq_mask=None, *, block_b=8):
    """hidden: (1, B, H); encoder_outputs: (S, B, I) seq-major; seq_mask: (B, S) bool
    or None.  Returns (B, 1, S) float32, matching the PyTorch module."""
    w_h, w_e, b_a, w_s = prepared
    S, B, I = encoder_outputs.shape
    H = w_h.shape[0]

    T_B = max(8, block_b)                    # sublane-aligned batch block
    B_pad = -(-B // T_B) * T_B
    S_pad = -(-S // 128) * 128               # lane-dense output width

    hid = hidden.reshape(B, H)
    enc = encoder_outputs                    # stays (S, B, I): no HBM transpose
    if seq_mask is None:
        mask_bias = jnp.zeros((B, S), jnp.float32)
    else:
        mask_bias = jnp.where(seq_mask, jnp.float32(-1e12), jnp.float32(0.0))
    if B_pad != B:
        hid = jnp.pad(hid, ((0, B_pad - B), (0, 0)))
        enc = jnp.pad(enc, ((0, 0), (0, B_pad - B), (0, 0)))
        mask_bias = jnp.pad(mask_bias, ((0, B_pad - B), (0, 0)))

    out = pl.pallas_call(
        tree_attn_kernel,
        out_shape=jax.ShapeDtypeStruct((B_pad, S_pad), jnp.float32),
        grid=(B_pad // T_B,),
        in_specs=[
            pl.BlockSpec((T_B, H), lambda b: (b, 0)),        # hidden rows
            pl.BlockSpec((S, T_B, I), lambda b: (0, b, 0)),  # encoder (seq-major)
            pl.BlockSpec((H, H), lambda b: (0, 0)),          # W_h
            pl.BlockSpec((I, H), lambda b: (0, 0)),          # W_e
            pl.BlockSpec((1, H), lambda b: (0, 0)),          # b_attn
            pl.BlockSpec((1, H), lambda b: (0, 0)),          # score row
            pl.BlockSpec((T_B, S), lambda b: (b, 0)),        # additive mask bias
        ],
        out_specs=pl.BlockSpec((T_B, S_pad), lambda b: (b, 0)),
        scratch_shapes=[pltpu.VMEM((T_B, S_pad), jnp.float32)],
        compiler_params=pltpu.CompilerParams(
            dimension_semantics=("parallel",)),
    )(hid, enc, w_h, w_e, b_a, w_s, mask_bias)

    return out[:B, :S].reshape(B, 1, S)


def tree_attn_reference(hidden, encoder_outputs, params, seq_mask=None):
    """Pure-JAX transcription of the PyTorch forward, for verification."""
    W_attn, b_attn, W_score, b_score = params
    S, B, I = encoder_outputs.shape
    H = hidden.shape[-1]
    hid_rep = jnp.broadcast_to(hidden, (S, B, H))
    energy_in = jnp.concatenate([hid_rep, encoder_outputs], axis=2).reshape(-1, H + I)
    feat = jnp.tanh(energy_in @ W_attn.T + b_attn)
    e = (feat @ W_score.T + b_score).reshape(S, B).T                    # (B, S)
    if seq_mask is not None:
        e = jnp.where(seq_mask, -1e12, e)
    return jax.nn.softmax(e, axis=1)[:, None, :]


if __name__ == "__main__":
    B, S = 2, 8
    input_size, hidden_size = 24, 32

    key = jax.random.PRNGKey(0)
    k_h, k_e, k_w1, k_b1, k_w2, k_b2 = jax.random.split(key, 6)

    fan1 = hidden_size + input_size
    W_attn = jax.random.uniform(k_w1, (hidden_size, fan1), jnp.float32,
                                -1.0 / math.sqrt(fan1), 1.0 / math.sqrt(fan1))
    b_attn = jax.random.uniform(k_b1, (hidden_size,), jnp.float32,
                                -1.0 / math.sqrt(fan1), 1.0 / math.sqrt(fan1))
    W_score = jax.random.uniform(k_w2, (1, hidden_size), jnp.float32,
                                 -1.0 / math.sqrt(hidden_size), 1.0 / math.sqrt(hidden_size))
    b_score = jax.random.uniform(k_b2, (1,), jnp.float32,
                                 -1.0 / math.sqrt(hidden_size), 1.0 / math.sqrt(hidden_size))
    params = (W_attn, b_attn, W_score, b_score)

    hidden = jax.random.normal(k_h, (1, B, hidden_size), jnp.float32)
    encoder_outputs = jax.random.normal(k_e, (S, B, input_size), jnp.float32)
    seq_mask = jnp.array([[False] * S,
                          [False] * (S - 3) + [True] * 3])               # (B, S) bool

    ref = tree_attn_reference(hidden, encoder_outputs, params, seq_mask)

    # default path: bf16 MXU operands, f32 accumulation / elementwise
    prepared_bf16 = prepare_tree_attn_params(params, hidden_size, jnp.bfloat16)
    out = jax.block_until_ready(
        tree_attn_forward(hidden, encoder_outputs, prepared_bf16, seq_mask))

    assert out.shape == (B, 1, S)
    assert jnp.allclose(jnp.sum(out, axis=-1), 1.0, atol=1e-2)
    assert jnp.allclose(out, ref, atol=5e-2), (
        f"bf16 mismatch: max abs err {jnp.max(jnp.abs(out - ref))}")

    # f32 MXU operands: tighter check against the PyTorch-equivalent reference
    prepared_f32 = prepare_tree_attn_params(params, hidden_size, jnp.float32)
    out32 = jax.block_until_ready(
        tree_attn_forward(hidden, encoder_outputs, prepared_f32, seq_mask))
    assert jnp.allclose(out32, ref, atol=1e-2), (
        f"f32 mismatch: max abs err {jnp.max(jnp.abs(out32 - ref))}")

    print("KERNEL_OK")
</pallas_src>

<mosaic_0001>
module attributes {stable_mosaic.version = 11 : i64} {
  func.func @tree_attn_kernel(%arg0: i32, %arg1: memref<8x32xf32, #tpu.memory_space<vmem>>, %arg2: memref<8x8x24xf32, #tpu.memory_space<vmem>>, %arg3: memref<32x32xbf16, #tpu.memory_space<vmem>>, %arg4: memref<24x32xbf16, #tpu.memory_space<vmem>>, %arg5: memref<1x32xf32, #tpu.memory_space<vmem>>, %arg6: memref<1x32xf32, #tpu.memory_space<vmem>>, %arg7: memref<8x8xf32, #tpu.memory_space<vmem>>, %arg8: memref<8x128xf32, #tpu.memory_space<vmem>>, %arg9: memref<8x128xf32, #tpu.memory_space<vmem>>) attributes {dimension_semantics = [#tpu.dimension_semantics<parallel>], iteration_bounds = array<i64: 1>, scalar_prefetch = 0 : i64, scratch_operands = 1 : i64, tpu.core_type = #tpu.core_type<tc>, window_params = [{transform_indices = @transform_0, window_bounds = array<i64: 8, 32>}, {transform_indices = @transform_1, window_bounds = array<i64: 8, 8, 24>}, {pipeline_mode = #tpu.pipeline_mode<synchronous>, transform_indices = @transform_2, window_bounds = array<i64: 32, 32>}, {pipeline_mode = #tpu.pipeline_mode<synchronous>, transform_indices = @transform_3, window_bounds = array<i64: 24, 32>}, {pipeline_mode = #tpu.pipeline_mode<synchronous>, transform_indices = @transform_4, window_bounds = array<i64: 1, 32>}, {pipeline_mode = #tpu.pipeline_mode<synchronous>, transform_indices = @transform_5, window_bounds = array<i64: 1, 32>}, {transform_indices = @transform_6, window_bounds = array<i64: 8, 8>}, {transform_indices = @transform_7, window_bounds = array<i64: 8, 128>}]} {
    %c0 = arith.constant 0 : index
    %c0_0 = arith.constant 0 : index
    %0 = vector.load %arg1[%c0, %c0_0] : memref<8x32xf32, #tpu.memory_space<vmem>>, vector<8x32xf32>
    %1 = arith.truncf %0 : vector<8x32xf32> to vector<8x32xbf16>
    %c0_1 = arith.constant 0 : index
    %c0_2 = arith.constant 0 : index
    %2 = vector.load %arg3[%c0_1, %c0_2] : memref<32x32xbf16, #tpu.memory_space<vmem>>, vector<32x32xbf16>
    %cst = arith.constant dense<0.000000e+00> : vector<8x32xf32>
    %3 = tpu.matmul %1, %2, %cst {dimension_numbers = #tpu.dot_dimension_numbers<[1], [0], [0], [1], [0, 0, 1, 1], [], []>} : vector<8x32xbf16>, vector<32x32xbf16>, vector<8x32xf32> -> vector<8x32xf32>
    %c0_3 = arith.constant 0 : index
    %c0_4 = arith.constant 0 : index
    %4 = vector.load %arg5[%c0_3, %c0_4] : memref<1x32xf32, #tpu.memory_space<vmem>>, vector<1x32xf32>
    %5 = vector.broadcast %4 : vector<1x32xf32> to vector<8x32xf32>
    %6 = arith.addf %3, %5 : vector<8x32xf32>
    %c0_5 = arith.constant 0 : index
    %c0_6 = arith.constant 0 : index
    %c0_7 = arith.constant 0 : index
    %7 = vector.load %arg2[%c0_5, %c0_6, %c0_7] : memref<8x8x24xf32, #tpu.memory_space<vmem>>, vector<8x8x24xf32>
    %8 = arith.truncf %7 : vector<8x8x24xf32> to vector<8x8x24xbf16>
    %9 = vector.shape_cast %8 : vector<8x8x24xbf16> to vector<64x24xbf16>
    %c0_8 = arith.constant 0 : index
    %c0_9 = arith.constant 0 : index
    %10 = vector.load %arg4[%c0_8, %c0_9] : memref<24x32xbf16, #tpu.memory_space<vmem>>, vector<24x32xbf16>
    %cst_10 = arith.constant dense<0.000000e+00> : vector<64x32xf32>
    %11 = tpu.matmul %9, %10, %cst_10 {dimension_numbers = #tpu.dot_dimension_numbers<[1], [0], [0], [1], [0, 0, 1, 1], [], []>} : vector<64x24xbf16>, vector<24x32xbf16>, vector<64x32xf32> -> vector<64x32xf32>
    %12 = vector.shape_cast %11 : vector<64x32xf32> to vector<8x8x32xf32>
    %13 = vector.shape_cast %6 : vector<8x32xf32> to vector<1x8x32xf32>
    %14 = vector.broadcast %13 : vector<1x8x32xf32> to vector<8x8x32xf32>
    %15 = arith.addf %12, %14 : vector<8x8x32xf32>
    %16 = math.tanh %15 : vector<8x8x32xf32>
    %c0_11 = arith.constant 0 : index
    %c0_12 = arith.constant 0 : index
    %17 = vector.load %arg6[%c0_11, %c0_12] : memref<1x32xf32, #tpu.memory_space<vmem>>, vector<1x32xf32>
    %18 = vector.shape_cast %17 : vector<1x32xf32> to vector<1x1x32xf32>
    %19 = vector.broadcast %18 : vector<1x1x32xf32> to vector<8x8x32xf32>
    %20 = arith.mulf %16, %19 : vector<8x8x32xf32>
    %cst_13 = arith.constant dense<0.000000e+00> : vector<8x8xf32>
    %21 = vector.multi_reduction <add>, %20, %cst_13 [2] : vector<8x8x32xf32> to vector<8x8xf32>
    %22 = tpu.iota {dimensions = array<i32: 0>} : vector<8x8xi32>
    %23 = tpu.iota {dimensions = array<i32: 1>} : vector<8x8xi32>
    %24 = arith.cmpi eq, %22, %23 : vector<8x8xi32>
    %25 = arith.extui %24 : vector<8x8xi1> to vector<8x8xi32>
    %26 = arith.sitofp %25 : vector<8x8xi32> to vector<8x8xf32>
    %cst_14 = arith.constant dense<0.000000e+00> : vector<8x8xf32>
    %27 = tpu.matmul %26, %21, %cst_14 {dimension_numbers = #tpu.dot_dimension_numbers<[1], [1], [0], [0], [0, 0, 1, 0], [], []>} : vector<8x8xf32>, vector<8x8xf32>, vector<8x8xf32> -> vector<8x8xf32>
    %c0_15 = arith.constant 0 : index
    %c0_16 = arith.constant 0 : index
    %28 = vector.load %arg7[%c0_15, %c0_16] : memref<8x8xf32, #tpu.memory_space<vmem>>, vector<8x8xf32>
    %29 = arith.addf %27, %28 : vector<8x8xf32>
    %cst_17 = arith.constant -1.000000e+30 : f32
    %30 = vector.broadcast %cst_17 : f32 to vector<8x128xf32>
    %c0_18 = arith.constant 0 : index
    %c0_19 = arith.constant 0 : index
    %31 = vector.load %arg9[%c0_18, %c0_19] : memref<8x128xf32, #tpu.memory_space<vmem>>, vector<8x128xf32>
    tpu.vector_store %arg9[%c0_18, %c0_19], %30 {strides = array<i32>} : memref<8x128xf32, #tpu.memory_space<vmem>>, vector<8x128xf32>,
    %c0_20 = arith.constant 0 : index
    %c0_21 = arith.constant 0 : index
    %32 = vector.load %arg9[%c0_20, %c0_21] : memref<8x128xf32, #tpu.memory_space<vmem>>, vector<8x8xf32>
    tpu.vector_store %arg9[%c0_20, %c0_21], %29 {strides = array<i32>} : memref<8x128xf32, #tpu.memory_space<vmem>>, vector<8x8xf32>,
    %c0_22 = arith.constant 0 : index
    %c0_23 = arith.constant 0 : index
    %33 = vector.load %arg9[%c0_22, %c0_23] : memref<8x128xf32, #tpu.memory_space<vmem>>, vector<8x128xf32>
    %cst_24 = arith.constant dense<0xFF800000> : vector<8xf32>
    %34 = vector.multi_reduction <maximumf>, %33, %cst_24 [1] : vector<8x128xf32> to vector<8xf32>
    %35 = vector.shape_cast %34 : vector<8xf32> to vector<8x1xf32>
    %36 = vector.broadcast %35 : vector<8x1xf32> to vector<8x128xf32>
    %37 = arith.subf %33, %36 : vector<8x128xf32>
    %38 = math.exp %37 : vector<8x128xf32>
    %cst_25 = arith.constant dense<0.000000e+00> : vector<8xf32>
    %39 = vector.multi_reduction <add>, %38, %cst_25 [1] : vector<8x128xf32> to vector<8xf32>
    %40 = vector.shape_cast %39 : vector<8xf32> to vector<8x1xf32>
    %41 = tpu.reciprocal %40 {approx = true} : vector<8x1xf32> -> vector<8x1xf32>
    %42 = vector.broadcast %41 : vector<8x1xf32> to vector<8x128xf32>
    %43 = arith.mulf %38, %42 : vector<8x128xf32>
    %c0_26 = arith.constant 0 : index
    %c0_27 = arith.constant 0 : index
    %44 = vector.load %arg8[%c0_26, %c0_27] : memref<8x128xf32, #tpu.memory_space<vmem>>, vector<8x128xf32>
    tpu.vector_store %arg8[%c0_26, %c0_27], %43 {strides = array<i32>} : memref<8x128xf32, #tpu.memory_space<vmem>>, vector<8x128xf32>,
    return
  }
  func.func @transform_0(%arg0: i32) -> (i32, i32) {
    %c0_i32 = arith.constant 0 : i32
    %c0_i32_0 = arith.constant 0 : i32
    return %arg0, %c0_i32 : i32, i32
  }
  func.func @transform_1(%arg0: i32) -> (i32, i32, i32) {
    %c0_i32 = arith.constant 0 : i32
    %c0_i32_0 = arith.constant 0 : i32
    %c0_i32_1 = arith.constant 0 : i32
    return %c0_i32, %arg0, %c0_i32_0 : i32, i32, i32
  }
  func.func @transform_2(%arg0: i32) -> (i32, i32) {
    %c0_i32 = arith.constant 0 : i32
    %c0_i32_0 = arith.constant 0 : i32
    %c0_i32_1 = arith.constant 0 : i32
    return %c0_i32, %c0_i32_0 : i32, i32
  }
  func.func @transform_3(%arg0: i32) -> (i32, i32) {
    %c0_i32 = arith.constant 0 : i32
    %c0_i32_0 = arith.constant 0 : i32
    %c0_i32_1 = arith.constant 0 : i32
    return %c0_i32, %c0_i32_0 : i32, i32
  }
  func.func @transform_4(%arg0: i32) -> (i32, i32) {
    %c0_i32 = arith.constant 0 : i32
    %c0_i32_0 = arith.constant 0 : i32
    %c0_i32_1 = arith.constant 0 : i32
    return %c0_i32, %c0_i32_0 : i32, i32
  }
  func.func @transform_5(%arg0: i32) -> (i32, i32) {
    %c0_i32 = arith.constant 0 : i32
    %c0_i32_0 = arith.constant 0 : i32
    %c0_i32_1 = arith.constant 0 : i32
    return %c0_i32, %c0_i32_0 : i32, i32
  }
  func.func @transform_6(%arg0: i32) -> (i32, i32) {
    %c0_i32 = arith.constant 0 : i32
    %c0_i32_0 = arith.constant 0 : i32
    return %arg0, %c0_i32 : i32, i32
  }
  func.func @transform_7(%arg0: i32) -> (i32, i32) {
    %c0_i32 = arith.constant 0 : i32
    %c0_i32_0 = arith.constant 0 : i32
    return %arg0, %c0_i32 : i32, i32
  }
}

</mosaic_0001>

<llo_original>
// kernel: tpu_custom_call.1
$region0: #{tpu_custom_call.1}
  #allocation0 [shape = 'u32[]', space=smem, size = 0x4, offset = 0x4, fixed_abs, tag = 'smem constant byte address 0x4 - core index']
  #allocation1 [shape = 'u32[144,128]{1,0:T(1,128)}', space=vmem, size = 0x12000, scoped, tag = 'internal scratch']
  #allocation2 [shape = 'f32[8,128]{1,0:T(8,128)}', space=vmem, size = 0x1000, scoped, tag = 'scratch operand']
  %s0 = inlined_call_operand.hbm [shape: f32[8,32], index: 0, kind: input, shape index: {}]
  %s1 = inlined_call_operand.hbm [shape: f32[8,8,24], index: 1, kind: input, shape index: {}]
  %s2 = inlined_call_operand.hbm [shape: bf16[32,32], index: 2, kind: input, shape index: {}]
  %s3 = inlined_call_operand.hbm [shape: bf16[24,32], index: 3, kind: input, shape index: {}]
  %s4 = inlined_call_operand.vmem [shape: f32[1,32], index: 4, kind: input, shape index: {}]
  %s5 = inlined_call_operand.vmem [shape: f32[1,32], index: 5, kind: input, shape index: {}]
  %s6 = inlined_call_operand.vmem [shape: f32[8,8], index: 6, kind: input, shape index: {}]
  %s7 = inlined_call_operand.hbm [shape: f32[8,128], index: 7, kind: output, shape index: {}]
  %s8 = sld [smem:[#allocation0]]
  $region54: #{tpu_custom_call.1} parent=0
    _
  %s10 = ssub.s32 1, %s8
  %s11 = scalar_select 0, %s10, %s8
  $region1: #{tpu_custom_call.1} parent=0
    #allocation3 [shape = 'u8[4096]{0}', space=vmem, size = 0x1000, scoped, tag = 'input window, operand 0, single buffered']
    #allocation4 [shape = 's32[1]{0}', space=sflag, size = 0x4, scoped, tag = 'scoped memory for tpu_custom_call.1']
    #allocation5 [shape = 's32[1]{0}', space=sflag, size = 0x4, scoped, tag = 'scoped memory for tpu_custom_call.1']
    #allocation6 [shape = 'u8[32768]{0}', space=vmem, size = 0x8000, scoped, tag = 'input window, operand 1, single buffered']
    #allocation7 [shape = 's32[1]{0}', space=sflag, size = 0x4, scoped, tag = 'scoped memory for tpu_custom_call.1']
    #allocation8 [shape = 'u8[8192]{0}', space=vmem, size = 0x2000, scoped, tag = 'input window, operand 2, single buffered']
    #allocation9 [shape = 'u8[6144]{0}', space=vmem, size = 0x1800, scoped, tag = 'input window, operand 3, single buffered']
    #allocation10 [shape = 's32[1]{0}', space=sflag, size = 0x4, scoped, tag = 'scoped memory for tpu_custom_call.1']
    #allocation11 [shape = 'u8[4096]{0}', space=vmem, size = 0x1000, scoped, tag = 'output window, operand 0, single buffered']
    %12 = vsyncpa [#allocation4], 0
    %13 = vsyncpa [#allocation7], 0
    %14 = vsyncpa [#allocation10], 0
    %15 = vsyncpa [#allocation5], 0
    // Predicated region
    $region2: #{tpu_custom_call.1} parent=1 // pred_check
      _
    $region3: #{tpu_custom_call.1} parent=1 // pred_check_branch
      %17 = sbr.rel (0) target = $region5
    $region4: #{tpu_custom_call.1} parent=1 // pred_region
      %s19 = ssub.s32 128, 128
      %20 = vsyncadd [#allocation4], %s19
      %s22 = sshll.u32 [#allocation3], 4
      %s23 = int_to_ptr.vmem [resolvable:$true] %s22
      %25 = dma.hbm_to_vmem [thread:$0]  %s0, 128, %s23, [#allocation4]
    $region5: #{tpu_custom_call.1} parent=1 // pred_fallthru
      _
    // Predicated region
    $region6: #{tpu_custom_call.1} parent=1 // pred_check
      _
    $region7: #{tpu_custom_call.1} parent=1 // pred_check_branch
      %27 = sbr.rel (0) target = $region9
    $region8: #{tpu_custom_call.1} parent=1 // pred_region
      %s29 = ssub.s32 1024, 1024
      %30 = vsyncadd [#allocation7], %s29
      %s31 = sshll.u32 [#allocation6], 4
      %s32 = int_to_ptr.vmem [resolvable:$true] %s31
      %37 = dma.hbm_to_vmem [thread:$0]  %s1, 1024, %s32, [#allocation7], 128, 128, 8
    $region9: #{tpu_custom_call.1} parent=1 // pred_fallthru
      _
    // Predicated region
    $region10: #{tpu_custom_call.1} parent=1 // pred_check
      _
    $region11: #{tpu_custom_call.1} parent=1 // pred_check_branch
      %39 = sbr.rel (0) target = $region13
    $region12: #{tpu_custom_call.1} parent=1 // pred_region
      %s41 = ssub.s32 256, 256
      %42 = vsyncadd [#allocation7], %s41
      %s43 = sshll.u32 [#allocation8], 4
      %s44 = int_to_ptr.vmem [resolvable:$true] %s43
      %49 = dma.hbm_to_vmem [thread:$0]  %s2, 256, %s44, [#allocation7], 64, 64, 4
    $region13: #{tpu_custom_call.1} parent=1 // pred_fallthru
      _
    // Predicated region
    $region14: #{tpu_custom_call.1} parent=1 // pred_check
      _
    $region15: #{tpu_custom_call.1} parent=1 // pred_check_branch
      %51 = sbr.rel (0) target = $region17
    $region16: #{tpu_custom_call.1} parent=1 // pred_region
      %s53 = ssub.s32 192, 192
      %54 = vsyncadd [#allocation10], %s53
      %s55 = sshll.u32 [#allocation9], 4
      %s56 = int_to_ptr.vmem [resolvable:$true] %s55
      %61 = dma.hbm_to_vmem [thread:$0]  %s3, 192, %s56, [#allocation10], 64, 64, 4
    $region17: #{tpu_custom_call.1} parent=1 // pred_fallthru
      _
    // Predicated region
    $region18: #{tpu_custom_call.1} parent=1 // pred_check
      _
    $region19: #{tpu_custom_call.1} parent=1 // pred_check_branch
      %63 = sbr.rel (0) target = $region21
    $region20: #{tpu_custom_call.1} parent=1 // pred_region
      _
    $region21: #{tpu_custom_call.1} parent=1 // pred_fallthru
      _
    // Predicated region
    $region22: #{tpu_custom_call.1} parent=1 // pred_check
      _
    $region23: #{tpu_custom_call.1} parent=1 // pred_check_branch
      %65 = sbr.rel (0) target = $region25
    $region24: #{tpu_custom_call.1} parent=1 // pred_region
      _
    $region25: #{tpu_custom_call.1} parent=1 // pred_fallthru
      _
    // Predicated region
    $region26: #{tpu_custom_call.1} parent=1 // pred_check
      _
    $region27: #{tpu_custom_call.1} parent=1 // pred_check_branch
      %67 = sbr.rel (0) target = $region29
    $region28: #{tpu_custom_call.1} parent=1 // pred_region
      _
    $region29: #{tpu_custom_call.1} parent=1 // pred_fallthru
      _
    // Predicated region
    $region30: #{tpu_custom_call.1} parent=1 // pred_check
      _
    $region31: #{tpu_custom_call.1} parent=1 // pred_check_branch
      %69 = sbr.rel (0) target = $region33
    $region32: #{tpu_custom_call.1} parent=1 // pred_region
      %70 = dma.done [#allocation4], 128
    $region33: #{tpu_custom_call.1} parent=1 // pred_fallthru
      _
    // Predicated region
    $region34: #{tpu_custom_call.1} parent=1 // pred_check
      _
    $region35: #{tpu_custom_call.1} parent=1 // pred_check_branch
      %72 = sbr.rel (0) target = $region37
    $region36: #{tpu_custom_call.1} parent=1 // pred_region
      %73 = dma.done [#allocation7], 1024
    $region37: #{tpu_custom_call.1} parent=1 // pred_fallthru
      _
    // Predicated region
    $region38: #{tpu_custom_call.1} parent=1 // pred_check
      _
    $region39: #{tpu_custom_call.1} parent=1 // pred_check_branch
      %75 = sbr.rel (0) target = $region41
    $region40: #{tpu_custom_call.1} parent=1 // pred_region
      %76 = dma.done [#allocation7], 256
    $region41: #{tpu_custom_call.1} parent=1 // pred_fallthru
      _
    // Predicated region
    $region42: #{tpu_custom_call.1} parent=1 // pred_check
      _
    $region43: #{tpu_custom_call.1} parent=1 // pred_check_branch
      %78 = sbr.rel (0) target = $region45
    $region44: #{tpu_custom_call.1} parent=1 // pred_region
      %79 = dma.done [#allocation10], 192
    $region45: #{tpu_custom_call.1} parent=1 // pred_fallthru
      _
    %v81 = vld [vmem:[#allocation3] sm:$0xff]
    %v82 = vpack.c.bf16 %v81, %v81
    %v83 = vld [vmem:[#allocation8] sm:$0xf]
    %v84 = vld [vmem:[#allocation8 + $0x4] sm:$0xf]
    %v85 = vld [vmem:[#allocation8 + $0x8] sm:$0xf]
    %v86 = vld [vmem:[#allocation8 + $0xc] sm:$0xf]
    %v87 = vld [vmem:[%s4] sm:$0x1]
    %v89 = vlaneseq
    %v90 = vshrl.u32 %v89, 7
    %v91 = vsub.s32 0, %v90
    %v92 = vrot.slane %v87, %v91
    %v98 = vunpack.c.l.b16 %v83
    %v99 = vunpack.c.l.b16 %v84
    %v100 = vunpack.c.l.b16 %v85
    %v101 = vunpack.c.l.b16 %v86
    %v102 = vpack.c.b16 %v99, %v98
    %v103 = vpack.c.b16 %v101, %v100
    %vm106 = vcmask 261120
    %v108 = vsel %vm106, %v82, 0
    %110 = vmatprep.subr.bf16.mxu0 0
    %111 = vmatpush1.bf16.msra.mxu0 %v102
    %112 = vmatprep.subr.bf16.mxu0 0
    %113 = vmatpush1.bf16.msra.mxu0 %v103
    %114 = vmatprep.subr.bf16.mxu0 0
    %115 = vmatpush1.bf16.msra.mxu0 0
    %116 = vmatprep.subr.bf16.mxu0 0
    %117 = vmatpush1.bf16.msra.mxu0 0
    %118 = vmatprep.subr.bf16.mxu0 0
    %119 = vmatpush1.bf16.msra.mxu0 0
    %120 = vmatprep.subr.bf16.mxu0 0
    %121 = vmatpush1.bf16.msra.mxu0 0
    %122 = vmatprep.subr.bf16.mxu0 0
    %123 = vmatpush1.bf16.msra.mxu0 0
    %124 = vmatprep.subr.bf16.mxu0 0
    %125 = vmatpush1.bf16.msra.mxu0 0
    %126 = vmatprep.subr.bf16.mxu0 0
    %127 = vmatpush1.bf16.msra.mxu0 0
    %128 = vmatprep.subr.bf16.mxu0 0
    %129 = vmatpush1.bf16.msra.mxu0 0
    %130 = vmatprep.subr.bf16.mxu0 0
    %131 = vmatpush1.bf16.msra.mxu0 0
    %132 = vmatprep.subr.bf16.mxu0 0
    %133 = vmatpush1.bf16.msra.mxu0 0
    %134 = vmatprep.subr.bf16.mxu0 0
    %135 = vmatpush1.bf16.msra.mxu0 0
    %136 = vmatprep.subr.bf16.mxu0 0
    %137 = vmatpush1.bf16.msra.mxu0 0
    %138 = vmatprep.subr.bf16.mxu0 0
    %139 = vmatpush1.bf16.msra.mxu0 0
    %140 = vmatprep.subr.bf16.mxu0 0
    %141 = vmatpush1.bf16.msra.mxu0 0
    %142 = vmatprep.mubr.bf16.mxu0 0
    %143 = vmatmul.mubr.bf16.gmra.mrb[0].mxu0 %v108
    %v144 = vpop.f32.mrb[0].mxu0
    %v145 = vadd.f32 %v92, %v144
    %v146 = vpop.f32.mrb[0].mxu0
    %v147 = vpop.f32.mrb[0].mxu0
    %v148 = vpop.f32.mrb[0].mxu0
    %149 = vdwg.mxu0
    %v150 = vld [vmem:[#allocation6] sm:$0xff]
    %v151 = vld [vmem:[#allocation6 + $0x8] sm:$0xff]
    %v152 = vld [vmem:[#allocation6 + $0x10] sm:$0xff]
    %v153 = vld [vmem:[#allocation6 + $0x18] sm:$0xff]
    %v154 = vld [vmem:[#allocation6 + $0x20] sm:$0xff]
    %v155 = vld [vmem:[#allocation6 + $0x28] sm:$0xff]
    %v156 = vld [vmem:[#allocation6 + $0x30] sm:$0xff]
    %v157 = vld [vmem:[#allocation6 + $0x38] sm:$0xff]
    %v158 = vpack.c.bf16 %v150, %v150
    %v159 = vpack.c.bf16 %v151, %v151
    %v160 = vpack.c.bf16 %v152, %v152
    %v161 = vpack.c.bf16 %v153, %v153
    %v162 = vpack.c.bf16 %v154, %v154
    %v163 = vpack.c.bf16 %v155, %v155
    %v164 = vpack.c.bf16 %v156, %v156
    %v165 = vpack.c.bf16 %v157, %v157
    %v166 = vld [vmem:[#allocation9] sm:$0xf]
    %v167 = vld [vmem:[#allocation9 + $0x4] sm:$0xf]
    %v168 = vld [vmem:[#allocation9 + $0x8] sm:$0xf]
    %v177 = vunpack.c.l.b16 %v158
    %v178 = vunpack.c.l.b16 %v159
    %v179 = vunpack.c.l.b16 %v160
    %v180 = vunpack.c.l.b16 %v161
    %v181 = vunpack.c.l.b16 %v162
    %v182 = vunpack.c.l.b16 %v163
    %v183 = vunpack.c.l.b16 %v164
    %v184 = vunpack.c.l.b16 %v165
    %v185 = vpack.c.b16 %v178, %v177
    %v186 = vpack.c.b16 %v180, %v179
    %v187 = vpack.c.b16 %v182, %v181
    %v188 = vpack.c.b16 %v184, %v183
    %v192 = vunpack.c.l.b16 %v166
    %v193 = vunpack.c.l.b16 %v167
    %v194 = vunpack.c.l.b16 %v168
    %v195 = vpack.c.b16 %v193, %v192
    %v196 = vpack.c.b16 %v194, %v194
    %vm198 = vcmask 195584
    %v200 = vsel %vm198, %v185, 0
    %v203 = vsel %vm198, %v186, 0
    %v206 = vsel %vm198, %v187, 0
    %v209 = vsel %vm198, %v188, 0
    %vm211 = vcmask 1043456
    %v213 = vsel %vm211, %v196, 0
    %215 = vmatprep.subr.bf16.mxu0 0
    %216 = vmatpush1.bf16.msra.mxu0 %v195
    %217 = vmatprep.subr.bf16.mxu0 0
    %218 = vmatpush1.bf16.msra.mxu0 %v213
    %219 = vmatprep.subr.bf16.mxu0 0
    %220 = vmatpush1.bf16.msra.mxu0 0
    %221 = vmatprep.subr.bf16.mxu0 0
    %222 = vmatpush1.bf16.msra.mxu0 0
    %223 = vmatprep.subr.bf16.mxu0 0
    %224 = vmatpush1.bf16.msra.mxu0 0
    %225 = vmatprep.subr.bf16.mxu0 0
    %226 = vmatpush1.bf16.msra.mxu0 0
    %227 = vmatprep.subr.bf16.mxu0 0
    %228 = vmatpush1.bf16.msra.mxu0 0
    %229 = vmatprep.subr.bf16.mxu0 0
    %230 = vmatpush1.bf16.msra.mxu0 0
    %231 = vmatprep.subr.bf16.mxu0 0
    %232 = vmatpush1.bf16.msra.mxu0 0
    %233 = vmatprep.subr.bf16.mxu0 0
    %234 = vmatpush1.bf16.msra.mxu0 0
    %235 = vmatprep.subr.bf16.mxu0 0
    %236 = vmatpush1.bf16.msra.mxu0 0
    %237 = vmatprep.subr.bf16.mxu0 0
    %238 = vmatpush1.bf16.msra.mxu0 0
    %239 = vmatprep.subr.bf16.mxu0 0
    %240 = vmatpush1.bf16.msra.mxu0 0
    %241 = vmatprep.subr.bf16.mxu0 0
    %242 = vmatpush1.bf16.msra.mxu0 0
    %243 = vmatprep.subr.bf16.mxu0 0
    %244 = vmatpush1.bf16.msra.mxu0 0
    %245 = vmatprep.subr.bf16.mxu0 0
    %246 = vmatpush1.bf16.msra.mxu0 0
    %247 = vmatprep.mubr.bf16.mxu0 0
    %248 = vmatmul.mubr.bf16.gmra.mrb[0].mxu0 %v200
    %v249 = vpop.f32.mrb[0].mxu0
    %v250 = vadd.f32 0.0, %v249
    %v251 = vpop.f32.mrb[0].mxu0
    %v252 = vpop.f32.mrb[0].mxu0
    %v253 = vadd.f32 0.0, %v252
    %v254 = vpop.f32.mrb[0].mxu0
    %255 = vmatprep.mubr.bf16.mxu0 0
    %256 = vmatmul.mubr.bf16.gmra.mrb[0].mxu0 %v203
    %v257 = vpop.f32.mrb[0].mxu0
    %v258 = vadd.f32 0.0, %v257
    %v259 = vpop.f32.mrb[0].mxu0
    %v260 = vpop.f32.mrb[0].mxu0
    %v261 = vadd.f32 0.0, %v260
    %v262 = vpop.f32.mrb[0].mxu0
    %263 = vmatprep.mubr.bf16.mxu0 0
    %264 = vmatmul.mubr.bf16.gmra.mrb[0].mxu0 %v206
    %v265 = vpop.f32.mrb[0].mxu0
    %v266 = vadd.f32 0.0, %v265
    %v267 = vpop.f32.mrb[0].mxu0
    %v268 = vpop.f32.mrb[0].mxu0
    %v269 = vadd.f32 0.0, %v268
    %v270 = vpop.f32.mrb[0].mxu0
    %271 = vmatprep.mubr.bf16.mxu0 0
    %272 = vmatmul.mubr.bf16.gmra.mrb[0].mxu0 %v209
    %v273 = vpop.f32.mrb[0].mxu0
    %v274 = vadd.f32 0.0, %v273
    %v275 = vpop.f32.mrb[0].mxu0
    %v276 = vpop.f32.mrb[0].mxu0
    %v277 = vadd.f32 0.0, %v276
    %v278 = vpop.f32.mrb[0].mxu0
    %279 = vdwg.mxu0
    %v280 = vadd.f32 %v250, %v145
    %v281 = vadd.f32 %v253, %v145
    %v282 = vadd.f32 %v258, %v145
    %v283 = vadd.f32 %v261, %v145
    %v284 = vadd.f32 %v266, %v145
    %v285 = vadd.f32 %v269, %v145
    %v286 = vadd.f32 %v274, %v145
    %v287 = vadd.f32 %v277, %v145
    %v288 = vtanh.pop %v280
    %v289 = vtanh.pop %v281
    %v290 = vtanh.pop %v282
    %v291 = vtanh.pop %v283
    %v292 = vtanh.pop %v284
    %v293 = vtanh.pop %v285
    %v294 = vtanh.pop %v286
    %v295 = vtanh.pop %v287
    %v296 = vld [vmem:[%s5] sm:$0x1]
    %v298 = vlaneseq
    %v299 = vshrl.u32 %v298, 7
    %v300 = vsub.s32 0, %v299
    %v301 = vrot.slane %v296, %v300
    %v303 = vmul.f32 %v288, %v301
    %v304 = vmul.f32 %v289, %v301
    %v305 = vmul.f32 %v290, %v301
    %v306 = vmul.f32 %v291, %v301
    %v307 = vmul.f32 %v292, %v301
    %v308 = vmul.f32 %v293, %v301
    %v309 = vmul.f32 %v294, %v301
    %v310 = vmul.f32 %v295, %v301
    %v311 = vsel %vm106, %v303, 0.0
    %312 = vadd.xlane.f32.xlu0 %v311
    %v313 = vpop.xlane.xlu0 %312
    %v314 = vsel %vm106, %v304, 0.0
    %315 = vadd.xlane.f32.xlu0 %v314
    %v316 = vpop.xlane.xlu0 %315
    %v317 = vsel %vm106, %v305, 0.0
    %318 = vadd.xlane.f32.xlu0 %v317
    %v319 = vpop.xlane.xlu0 %318
    %v320 = vsel %vm106, %v306, 0.0
    %321 = vadd.xlane.f32.xlu0 %v320
    %v322 = vpop.xlane.xlu0 %321
    %v323 = vsel %vm106, %v307, 0.0
    %324 = vadd.xlane.f32.xlu0 %v323
    %v325 = vpop.xlane.xlu0 %324
    %v326 = vsel %vm106, %v308, 0.0
    %327 = vadd.xlane.f32.xlu0 %v326
    %v328 = vpop.xlane.xlu0 %327
    %v329 = vsel %vm106, %v309, 0.0
    %330 = vadd.xlane.f32.xlu0 %v329
    %v331 = vpop.xlane.xlu0 %330
    %v332 = vsel %vm106, %v310, 0.0
    %333 = vadd.xlane.f32.xlu0 %v332
    %v334 = vpop.xlane.xlu0 %333
    %v335 = vlaneseq
    %v336 = vshrl.u32 %v335, 7
    %v337 = vlaneseq
    %v338 = vand.u32 %v337, 127
    %vm339 = vcmp.eq.s32.totalorder %v336, %v338
    %v340 = vsel %vm339, 1, 0
    %v341 = vcvt.s32.f32 %v340
    %v342 = vld [vmem:[%s6] sm:$0xff]
    %v351 = vlaneseq
    %v352 = vshrl.u32 %v351, 7
    %v353 = vsub.s32 %v338, %v352
    %v354 = vrot.slane %v313, %v353
    %v355 = vlaneseq
    %v356 = vshrl.u32 %v355, 7
    %v357 = vsub.s32 %v338, %v356
    %v358 = vrot.slane %v316, %v357
    %v359 = vlaneseq
    %v360 = vshrl.u32 %v359, 7
    %v361 = vsub.s32 %v338, %v360
    %v362 = vrot.slane %v319, %v361
    %v363 = vlaneseq
    %v364 = vshrl.u32 %v363, 7
    %v365 = vsub.s32 %v338, %v364
    %v366 = vrot.slane %v322, %v365
    %v367 = vlaneseq
    %v368 = vshrl.u32 %v367, 7
    %v369 = vsub.s32 %v338, %v368
    %v370 = vrot.slane %v325, %v369
    %v371 = vlaneseq
    %v372 = vshrl.u32 %v371, 7
    %v373 = vsub.s32 %v338, %v372
    %v374 = vrot.slane %v328, %v373
    %v375 = vlaneseq
    %v376 = vshrl.u32 %v375, 7
    %v377 = vsub.s32 %v338, %v376
    %v378 = vrot.slane %v331, %v377
    %v379 = vlaneseq
    %v380 = vshrl.u32 %v379, 7
    %v381 = vsub.s32 %v338, %v380
    %v382 = vrot.slane %v334, %v381
    %vm383 = vcmask 1041409
    %v384 = vsel %vm383, %v358, %v354
    %vm385 = vcmask 1042434
    %v386 = vsel %vm385, %v362, %v384
    %vm387 = vcmask 1043459
    %v388 = vsel %vm387, %v366, %v386
    %vm389 = vcmask 1044484
    %v390 = vsel %vm389, %v370, %v388
    %vm391 = vcmask 1045509
    %v392 = vsel %vm391, %v374, %v390
    %vm393 = vcmask 1046534
    %v394 = vsel %vm393, %v378, %v392
    %vm395 = vcmask 1047559
    %v396 = vsel %vm395, %v382, %v394
    %vm397 = vcmask 64512
    %v399 = vsel %vm397, %v341, 0
    %v401 = vsel %vm397, %v396, 0
    %403 = vmatprep.subr.mxu0 0.0
    %404 = vmatpush1.xpose.msra.mxu0 %v401
    %405 = vmatprep.subr.mxu0 0.0
    %406 = vmatpush1.xpose.msra.mxu0 0.0
    %407 = vmatprep.subr.mxu0 0.0
    %408 = vmatpush1.xpose.msra.mxu0 0.0
    %409 = vmatprep.subr.mxu0 0.0
    %410 = vmatpush1.xpose.msra.mxu0 0.0
    %411 = vmatprep.subr.mxu0 0.0
    %412 = vmatpush1.xpose.msra.mxu0 0.0
    %413 = vmatprep.subr.mxu0 0.0
    %414 = vmatpush1.xpose.msra.mxu0 0.0
    %415 = vmatprep.subr.mxu0 0.0
    %416 = vmatpush1.xpose.msra.mxu0 0.0
    %417 = vmatprep.subr.mxu0 0.0
    %418 = vmatpush1.xpose.msra.mxu0 0.0
    %419 = vmatprep.subr.mxu0 0.0
    %420 = vmatpush1.xpose.msra.mxu0 0.0
    %421 = vmatprep.subr.mxu0 0.0
    %422 = vmatpush1.xpose.msra.mxu0 0.0
    %423 = vmatprep.subr.mxu0 0.0
    %424 = vmatpush1.xpose.msra.mxu0 0.0
    %425 = vmatprep.subr.mxu0 0.0
    %426 = vmatpush1.xpose.msra.mxu0 0.0
    %427 = vmatprep.subr.mxu0 0.0
    %428 = vmatpush1.xpose.msra.mxu0 0.0
    %429 = vmatprep.subr.mxu0 0.0
    %430 = vmatpush1.xpose.msra.mxu0 0.0
    %431 = vmatprep.subr.mxu0 0.0
    %432 = vmatpush1.xpose.msra.mxu0 0.0
    %433 = vmatprep.subr.mxu0 0.0
    %434 = vmatpush1.xpose.msra.mxu0 0.0
    %435 = vmatprep.subr.mxu0 0.0
    %436 = vmatpush1.xpose.msra.mxu0 0.0
    %437 = vmatprep.subr.mxu0 0.0
    %438 = vmatpush1.xpose.msra.mxu0 0.0
    %439 = vmatprep.subr.mxu0 0.0
    %440 = vmatpush1.xpose.msra.mxu0 0.0
    %441 = vmatprep.subr.mxu0 0.0
    %442 = vmatpush1.xpose.msra.mxu0 0.0
    %443 = vmatprep.subr.mxu0 0.0
    %444 = vmatpush1.xpose.msra.mxu0 0.0
    %445 = vmatprep.subr.mxu0 0.0
    %446 = vmatpush1.xpose.msra.mxu0 0.0
    %447 = vmatprep.subr.mxu0 0.0
    %448 = vmatpush1.xpose.msra.mxu0 0.0
    %449 = vmatprep.subr.mxu0 0.0
    %450 = vmatpush1.xpose.msra.mxu0 0.0
    %451 = vmatprep.subr.mxu0 0.0
    %452 = vmatpush1.xpose.msra.mxu0 0.0
    %453 = vmatprep.subr.mxu0 0.0
    %454 = vmatpush1.xpose.msra.mxu0 0.0
    %455 = vmatprep.subr.mxu0 0.0
    %456 = vmatpush1.xpose.msra.mxu0 0.0
    %457 = vmatprep.subr.mxu0 0.0
    %458 = vmatpush1.xpose.msra.mxu0 0.0
    %459 = vmatprep.subr.mxu0 0.0
    %460 = vmatpush1.xpose.msra.mxu0 0.0
    %461 = vmatprep.subr.mxu0 0.0
    %462 = vmatpush1.xpose.msra.mxu0 0.0
    %463 = vmatprep.subr.mxu0 0.0
    %464 = vmatpush1.xpose.msra.mxu0 0.0
    %465 = vmatprep.subr.mxu0 0.0
    %466 = vmatpush1.xpose.msra.mxu0 0.0
    %467 = vmatprep.mubr.f32.mxu0 0.0
    %468 = vmatmul.mubr.f32.gmra.mrb[0].mxu0 %v399
    %v469 = vpop.f32.mrb[0].mxu0
    %v470 = vadd.f32 %v342, %v469
    %v471 = vpop.f32.mrb[0].mxu0
    %472 = vdwg.mxu0
    %473 = vst [vmem:[#allocation2] sm:$0xff] -1e+30
    %474 = vst.msk [vmem:[#allocation2] sm:$0xff] %vm397, %v470
    %v475 = vld [vmem:[#allocation2] sm:$0xff]
    %476 = vmax.xlane.f32.xlu0 %v475
    %v477 = vpop.xlane.xlu0 %476
    %v478 = vsub.f32 %v475, %v477
    %v479 = vmul.f32 %v478, 1.442695
    %v480 = vpow.pop %v479
    %481 = vadd.xlane.f32.xlu0 %v480
    %v482 = vpop.xlane.xlu0 %481
    %v483 = vrcp.pop %v482
    %v484 = vmul.f32 %v480, %v483
    %485 = vst [vmem:[#allocation11] sm:$0xff] %v484
    // Predicated region
    $region46: #{tpu_custom_call.1} parent=1 // pred_check
      _
    $region47: #{tpu_custom_call.1} parent=1 // pred_check_branch
      %487 = sbr.rel (0) target = $region49
    $region48: #{tpu_custom_call.1} parent=1 // pred_region
      %s489 = ssub.s32 128, 128
      %490 = vsyncadd [#allocation5], %s489
      %s492 = sshll.u32 [#allocation11], 4
      %s493 = int_to_ptr.vmem [resolvable:$true] %s492
      %495 = dma.vmem_to_hbm [thread:$0]  %s493, 128, %s7, [#allocation5]
    $region49: #{tpu_custom_call.1} parent=1 // pred_fallthru
      _
    // Predicated region
    $region50: #{tpu_custom_call.1} parent=1 // pred_check
      _
    $region51: #{tpu_custom_call.1} parent=1 // pred_check_branch
      %497 = sbr.rel (0) target = $region53
    $region52: #{tpu_custom_call.1} parent=1 // pred_region
      %498 = dma.done [#allocation5], 128
    $region53: #{tpu_custom_call.1} parent=1 // pred_fallthru
      _
    %499 = vsyncpa [#allocation4], 1
    %500 = vsyncpa [#allocation7], 1
    %501 = vsyncpa [#allocation10], 1
    %502 = vsyncpa [#allocation5], 1

</llo_original>
